<compile_context>
chip_gen: v5e
topology: v5e:2x2
jax: 0.10.0
libtpu: 0.0.40
codegen_flags: <defaults>
</compile_context>

<pallas_src>
import functools

import jax
import jax.numpy as jnp
from jax.experimental import pallas as pl
from jax.experimental.pallas import tpu as pltpu


def _scale_kernel(x_ref, o_ref, *, scale, compute_dtype):
    # Mem-bound kernel: VPU has enormous slack, so compute in fp32 for half
    # dtypes (PyTorch opmath) and cast once at the store.
    x = x_ref[...].astype(compute_dtype)
    o_ref[...] = (x * scale).astype(o_ref.dtype)


def _cdiv(a, b):
    return -(-a // b)


def _round_up(v, m):
    return ((v + m - 1) // m) * m


def _chip_defaults():
    """(target_block_bytes, vmem_limit_bytes) tuned per TPU generation."""
    try:
        kind = jax.devices()[0].device_kind.lower()
    except Exception:  # pragma: no cover - interpret / unknown backend
        kind = ""
    if "v7" in kind or "7x" in kind:
        # 64 MiB physical VMEM per TC; 8 MiB blocks amortize the ~0.35 us/step
        # overhead at 3.2 TB/s, 48 MiB leaves compiler headroom.
        return 8 << 20, 48 << 20
    if "v6" in kind:
        # 128 MiB physical VMEM; bigger blocks are free to try.
        return 8 << 20, 64 << 20
    # v5e / unknown: 4 MiB blocks already <4% step overhead at ~820 GB/s.
    # 32 MiB raises v5e's 16 MiB scoped default and is safe everywhere.
    return 4 << 20, 32 << 20


def _pick_2d_view(total, row_granule, max_view_cols):
    """Pick a copy-free (rows, cols) factorization of `total`.

    Preference (all exact divisors, so the reshape is a free bitcast):
      rank 3: cols % 128 == 0 and rows >= row_granule  (lane + sublane dense)
      rank 2: cols % 128 == 0                          (lane dense, short rows;
                                                        only hit for <4 KiB)
      rank 1: cols >= 128 and rows >= row_granule      (masked lane edge —
                                                        far cheaper than 8x
                                                        sublane padding)
    Within a rank prefer the widest cols. Returns None if nothing qualifies
    (e.g. prime totals); caller falls back to bulk + XLA tail.
    """
    best = None  # (rank, cols)
    hi = min(max_view_cols, total)
    for c in range(128, hi + 1):
        if total % c:
            continue
        rows = total // c
        if c % 128 == 0 and rows >= row_granule:
            rank = 3
        elif c % 128 == 0:
            rank = 2
        elif rows >= row_granule:
            rank = 1
        else:
            continue
        cand = (rank, c)
        if best is None or cand > best:
            best = cand
    if best is None:
        return None
    cols = best[1]
    return total // cols, cols


def _choose_row_tile(rows, tc, item, block_bytes, row_granule):
    tr_target = max(1, block_bytes // (item * tc))
    if tr_target >= rows:
        return rows
    tr = max(row_granule, (tr_target // row_granule) * row_granule)
    if tr >= rows:
        return rows
    # Best effort: make the leading ("parallel") axis an even number of blocks
    # so v7x's two TensorCores get a balanced split.
    nb = _cdiv(rows, tr)
    if nb > 1 and nb % 2 == 1:
        tr_even = max(row_granule, _round_up(_cdiv(rows, nb + 1), row_granule))
        if _cdiv(rows, tr_even) % 2 == 0:
            tr = tr_even
    return tr


def _launch_scale_2d(x2d, *, scale, out_dtype, compute_dtype, row_granule,
                     block_bytes, vmem_limit_bytes, alias_input):
    rows, cols = x2d.shape
    max_item = max(jnp.dtype(x2d.dtype).itemsize, jnp.dtype(out_dtype).itemsize)

    # Lane tile: multiple of 128 (or the full dim). tc_cap accounts for the
    # sublane granule so short blocks never blow past block_bytes.
    tc_cap = max(128, (block_bytes // (max_item * row_granule)) // 128 * 128)
    tc = cols if cols <= tc_cap else tc_cap
    tr = _choose_row_tile(rows, tc, max_item, block_bytes, row_granule)

    grid = (_cdiv(rows, tr), _cdiv(cols, tc))

    kernel = functools.partial(_scale_kernel, scale=scale,
                               compute_dtype=compute_dtype)

    extra = {}
    if alias_input and jnp.dtype(x2d.dtype) == jnp.dtype(out_dtype):
        # Only useful when the caller actually donates the input buffer;
        # halves peak HBM footprint for large activations.
        extra["input_output_aliases"] = {0: 0}

    return pl.pallas_call(
        kernel,
        out_shape=jax.ShapeDtypeStruct((rows, cols), out_dtype),
        grid_spec=pltpu.PrefetchScalarGridSpec(
            num_scalar_prefetch=0,
            grid=grid,
            in_specs=[pl.BlockSpec((tr, tc), lambda i, j: (i, j))],
            out_specs=pl.BlockSpec((tr, tc), lambda i, j: (i, j)),
        ),
        compiler_params=pltpu.CompilerParams(
            # Both axes independent -> shard across TCs on megacore / v7x.
            dimension_semantics=("parallel", "parallel"),
            vmem_limit_bytes=vmem_limit_bytes,
        ),
        **extra,
    )(x2d)


def scale_forward(x, scale, *, target_block_bytes=None, vmem_limit_bytes=None,
                  max_view_cols=32768, donate_input=False):
    """Elementwise x * scale via a Pallas TPU kernel (no padding copies)."""
    x = jnp.asarray(x)

    # Result dtype follows jnp/PyTorch weak-typed promotion for
    # `tensor * python_scalar` (int32*0.5 -> f32, bf16*0.5 -> bf16, ...).
    out_dtype = jax.eval_shape(
        lambda a: a * scale, jax.ShapeDtypeStruct((), x.dtype)
    ).dtype
    # PyTorch does fp32 opmath for scalar mul of half-precision tensors.
    if jnp.issubdtype(out_dtype, jnp.floating):
        compute_dtype = jnp.promote_types(out_dtype, jnp.float32)
    else:
        compute_dtype = out_dtype

    orig_shape = x.shape
    total = x.size
    # Degenerate / tiny inputs: a kernel launch buys nothing.
    if total == 0 or x.ndim == 0 or total < 1024:
        return (x.astype(compute_dtype) * scale).astype(out_dtype)

    if target_block_bytes is None or vmem_limit_bytes is None:
        chip_block, chip_vmem = _chip_defaults()
        if target_block_bytes is None:
            target_block_bytes = chip_block
        if vmem_limit_bytes is None:
            vmem_limit_bytes = chip_vmem

    in_item = jnp.dtype(x.dtype).itemsize
    out_item = jnp.dtype(out_dtype).itemsize
    max_item = max(in_item, out_item)
    # Sub-32-bit dtypes pack along sublanes: keep row tiles a multiple of
    # 8 (f32), 16 (bf16/f16) or 32 (int8/fp8) so packed stores stay unmasked.
    row_granule = max(8, 32 // min(in_item, out_item))

    # Guarantee a multi-block grid for mid-size tensors: >= ~8 grid steps so
    # the in-DMA of block i+1 overlaps the out-DMA of block i-1 and both TCs
    # on v7x get work.  Below ~2 MiB a single block is fine.
    total_bytes = total * max_item
    block_bytes = target_block_bytes
    if total_bytes > (2 << 20):
        block_bytes = min(target_block_bytes, total_bytes // 8)
    block_bytes = max(block_bytes, row_granule * 128 * max_item)

    launch = functools.partial(
        _launch_scale_2d, scale=scale, out_dtype=out_dtype,
        compute_dtype=compute_dtype, row_granule=row_granule,
        block_bytes=block_bytes, vmem_limit_bytes=vmem_limit_bytes,
        alias_input=donate_input)

    view = _pick_2d_view(total, row_granule, max_view_cols)
    if view is not None:
        rows, cols = view
        out2d = launch(x.reshape(rows, cols))  # free bitcast reshape
        return out2d.reshape(orig_shape)

    # Fully ragged total (e.g. prime 1D length): no exact 2D factorization
    # with a sane layout exists.  Run the lane-dense bulk through the kernel
    # and let XLA scale the tiny (< 4096 element) tail.
    cols = 4096
    rows = total // cols
    flat = x.reshape(total)
    if rows == 0:
        return (x.astype(compute_dtype) * scale).astype(out_dtype)
    split = rows * cols
    bulk = launch(flat[:split].reshape(rows, cols)).reshape(split)
    tail = (flat[split:].astype(compute_dtype) * scale).astype(out_dtype)
    return jnp.concatenate([bulk, tail]).reshape(orig_shape)


class ScalePallas:
    """JAX/Pallas equivalent of the PyTorch Scale module."""

    def __init__(self, scale):
        self.scale = scale  # deterministic constructor arg, no learned params
        # jit so reshape -> pallas_call -> reshape is one dispatch and the
        # reshapes stay copy-free views; `scale` is baked in as a constant.
        self._forward = jax.jit(functools.partial(scale_forward, scale=scale))

    def __call__(self, x):
        return self._forward(x)


if __name__ == "__main__":
    key = jax.random.PRNGKey(0)
    # NCHW-style input, small shapes: batch=2, channels=4, spatial=16x16.
    x = jax.random.normal(key, (2, 4, 16, 16), dtype=jnp.float32)

    scale = 0.5
    module = ScalePallas(scale)

    out = jax.block_until_ready(module(x))

    ref = x * scale
    assert out.shape == x.shape and out.dtype == x.dtype
    assert jnp.allclose(out, ref, atol=1e-6, rtol=1e-6)

    print("KERNEL_OK")
</pallas_src>

<mosaic_0001>
module attributes {stable_mosaic.version = 11 : i64} {
  func.func @_scale_kernel(%arg0: i32, %arg1: i32, %arg2: memref<8x256xf32, #tpu.memory_space<vmem>>, %arg3: memref<8x256xf32, #tpu.memory_space<vmem>>) attributes {dimension_semantics = [#tpu.dimension_semantics<parallel>, #tpu.dimension_semantics<parallel>], iteration_bounds = array<i64: 1, 1>, scalar_prefetch = 0 : i64, scratch_operands = 0 : i64, tpu.core_type = #tpu.core_type<tc>, window_params = [{transform_indices = @transform_0, window_bounds = array<i64: 8, 256>}, {transform_indices = @transform_1, window_bounds = array<i64: 8, 256>}]} {
    %c0 = arith.constant 0 : index
    %c0_0 = arith.constant 0 : index
    %0 = vector.load %arg2[%c0, %c0_0] : memref<8x256xf32, #tpu.memory_space<vmem>>, vector<8x256xf32>
    %cst = arith.constant 5.000000e-01 : f32
    %1 = vector.broadcast %cst : f32 to vector<8x256xf32>
    %2 = arith.mulf %0, %1 : vector<8x256xf32>
    %c0_1 = arith.constant 0 : index
    %c0_2 = arith.constant 0 : index
    %3 = vector.load %arg3[%c0_1, %c0_2] : memref<8x256xf32, #tpu.memory_space<vmem>>, vector<8x256xf32>
    tpu.vector_store %arg3[%c0_1, %c0_2], %2 {strides = array<i32>} : memref<8x256xf32, #tpu.memory_space<vmem>>, vector<8x256xf32>,
    return
  }
  func.func @transform_0(%arg0: i32, %arg1: i32) -> (i32, i32) {
    %c0_i32 = arith.constant 0 : i32
    return %arg0, %arg1 : i32, i32
  }
  func.func @transform_1(%arg0: i32, %arg1: i32) -> (i32, i32) {
    %c0_i32 = arith.constant 0 : i32
    return %arg0, %arg1 : i32, i32
  }
}

</mosaic_0001>

<llo_original>
// kernel: scale_forward.1
$region0: #{scale_forward.1}
  #allocation0 [shape = 'u32[]', space=smem, size = 0x4, offset = 0x4, fixed_abs, tag = 'smem constant byte address 0x4 - core index']
  #allocation1 [shape = 'u32[72,128]{1,0:T(1,128)}', space=vmem, size = 0x9000, scoped, tag = 'internal scratch']
  %s0 = inlined_call_operand.vmem [shape: f32[8,256], index: 0, kind: input, shape index: {}]
  %s1 = inlined_call_operand.vmem [shape: f32[8,256], index: 1, kind: output, shape index: {}]
  %s2 = sld [smem:[#allocation0]]
  $region14: #{scale_forward.1} parent=0
    _
  %s4 = ssub.s32 1, %s2
  %s5 = scalar_select 0, %s4, %s2
  // Predicated region
  $region2: #{scale_forward.1} parent=0 // pred_check
    _
  $region3: #{scale_forward.1} parent=0 // pred_check_branch
    %7 = sbr.rel (0) target = $region5
  $region4: #{scale_forward.1} parent=0 // pred_region
    _
  $region5: #{scale_forward.1} parent=0 // pred_fallthru
    _
  %v8 = vld [vmem:[%s0] sm:$0xff]
  %v9 = vld [vmem:[%s0 + $0x8] sm:$0xff]
  %v10 = vmul.f32 %v8, 0.5
  %v11 = vmul.f32 %v9, 0.5
  %12 = vst [vmem:[%s1] sm:$0xff] %v10
  %13 = vst [vmem:[%s1 + $0x8] sm:$0xff] %v11
  // Predicated region
  $region6: #{scale_forward.1} parent=0 // pred_check
    _
  $region7: #{scale_forward.1} parent=0 // pred_check_branch
    %15 = sbr.rel (0) target = $region9
  $region8: #{scale_forward.1} parent=0 // pred_region
    _
  $region9: #{scale_forward.1} parent=0 // pred_fallthru
    _
  // Predicated region
  $region10: #{scale_forward.1} parent=0 // pred_check
    _
  $region11: #{scale_forward.1} parent=0 // pred_check_branch
    %17 = sbr.rel (0) target = $region13
  $region12: #{scale_forward.1} parent=0 // pred_region
    _
  $region13: #{scale_forward.1} parent=0 // pred_fallthru
    _

</llo_original>
